<compile_context>
chip_gen: v6e
topology: v6e:2x2x1
jax: 0.10.0
libtpu: 0.0.40
codegen_flags: <defaults>
</compile_context>

<pallas_src>
import jax
import jax.numpy as jnp
from jax import lax
from jax.experimental import pallas as pl
from jax.experimental.pallas import tpu as pltpu


def _distmult_kernel(hr_ref, e_ref, o_ref, acc_ref):
    # grid = (B_pad//tm, N_pad//tn, D_pad//tk); reduction axis (k) is last.
    @pl.when(pl.program_id(2) == 0)
    def _():
        acc_ref[...] = jnp.zeros_like(acc_ref)

    # hr[tm, tk] contracted against E[tn, tk] on the last dim of both
    # operands -> [tm, tn].  Entity table keeps its natural [N, D] layout,
    # so no transpose ever touches HBM.
    acc_ref[...] += lax.dot_general(
        hr_ref[...], e_ref[...],
        dimension_numbers=(((1,), (1,)), ((), ())),
        preferred_element_type=jnp.float32)

    @pl.when(pl.program_id(2) == pl.num_programs(2) - 1)
    def _():
        o_ref[...] = acc_ref[...].astype(o_ref.dtype)


def _round_up(x, m):
    return (x + m - 1) // m * m


def distmult_score(h, r, entity_weight, *, tn=None, tk=None, tm_cap=256,
                   vmem_limit_bytes=48 * 1024 * 1024):
    """1-N DistMult score: (h * r) @ entity_weight.T (eval-mode dropout = identity)."""
    # TODO(synk): training-mode dropout on h and r is not implemented (module
    # is reproduced in eval mode, where F.dropout is the identity).
    B, D = h.shape
    N, D2 = entity_weight.shape
    assert D == D2 and r.shape == (B, D)

    # Fuse h*r once outside the kernel (tiny B x D elementwise op, XLA fuses
    # it); removes one redundant per-N-tile input stream from the kernel.
    hr = h * r
    out_dtype = hr.dtype

    # ---- tile selection ----------------------------------------------------
    # Reduction tile: take the whole embedding dim when it fits (<=512), so
    # the reduction grid axis usually collapses to a single step.
    if tk is None:
        tk = min(512, _round_up(D, 128))
    tk = max(128, _round_up(tk, 128))
    D_pad = _round_up(D, tk)

    # N tile: wide (up to 1024, 256-aligned) -> lane-dense unmasked output
    # stores and long contiguous DMAs on the dominant entity stream.
    if tn is None:
        tn = min(1024, _round_up(N, 256))
    tn = max(128, _round_up(tn, 128))
    N_pad = _round_up(N, tn)

    # Batch tile: cover the whole (padded) batch, capped to keep the output
    # tile / f32 accumulator modest.
    tm = min(_round_up(B, 8), _round_up(tm_cap, 8))
    B_pad = _round_up(B, tm)
    # ------------------------------------------------------------------------

    if (B_pad, D_pad) != (B, D):
        hr = jnp.pad(hr, ((0, B_pad - B), (0, D_pad - D)))
    e = entity_weight
    if (N_pad, D_pad) != (N, D):
        e = jnp.pad(e, ((0, N_pad - N), (0, D_pad - D)))

    grid = (B_pad // tm, N_pad // tn, D_pad // tk)

    out = pl.pallas_call(
        _distmult_kernel,
        out_shape=jax.ShapeDtypeStruct((B_pad, N_pad), out_dtype),
        grid_spec=pltpu.PrefetchScalarGridSpec(
            num_scalar_prefetch=0,
            grid=grid,
            in_specs=[
                pl.BlockSpec((tm, tk), lambda i, j, k: (i, k)),   # hr  [B, D]
                pl.BlockSpec((tn, tk), lambda i, j, k: (j, k)),   # E   [N, D]
            ],
            out_specs=pl.BlockSpec((tm, tn), lambda i, j, k: (i, j)),
            scratch_shapes=[pltpu.VMEM((tm, tn), jnp.float32)],
        ),
        compiler_params=pltpu.CompilerParams(
            dimension_semantics=("parallel", "parallel", "arbitrary"),
            vmem_limit_bytes=vmem_limit_bytes),
    )(hr, e)

    if (B_pad, N_pad) != (B, N):
        out = out[:B, :N]
    return out


if __name__ == "__main__":
    # Deterministic synthetic inputs (small shapes).
    key = jax.random.PRNGKey(0)

    # --- aligned case ---
    B, D, N = 8, 128, 256
    kh, kr, ke = jax.random.split(key, 3)
    h = jax.random.normal(kh, (B, D), dtype=jnp.float32)
    r = jax.random.normal(kr, (B, D), dtype=jnp.float32)
    entity_weight = jax.random.normal(ke, (N, D), dtype=jnp.float32)

    score = distmult_score(h, r, entity_weight)
    score = jax.block_until_ready(score)
    ref = (h * r) @ entity_weight.T
    assert score.shape == (B, N)
    assert jnp.allclose(score, ref, atol=1e-4, rtol=1e-4)

    # --- ragged case (exercises the padding path) ---
    B2, D2, N2 = 5, 100, 300
    kh2, kr2, ke2 = jax.random.split(jax.random.PRNGKey(1), 3)
    h2 = jax.random.normal(kh2, (B2, D2), dtype=jnp.float32)
    r2 = jax.random.normal(kr2, (B2, D2), dtype=jnp.float32)
    e2 = jax.random.normal(ke2, (N2, D2), dtype=jnp.float32)

    score2 = distmult_score(h2, r2, e2)
    score2 = jax.block_until_ready(score2)
    ref2 = (h2 * r2) @ e2.T
    assert score2.shape == (B2, N2)
    assert jnp.allclose(score2, ref2, atol=1e-4, rtol=1e-4)

    print("KERNEL_OK")
</pallas_src>

<mosaic_0001>
module attributes {stable_mosaic.version = 11 : i64} {
  func.func @_distmult_kernel(%arg0: i32, %arg1: i32, %arg2: i32, %arg3: memref<8x128xf32, #tpu.memory_space<vmem>>, %arg4: memref<256x128xf32, #tpu.memory_space<vmem>>, %arg5: memref<8x256xf32, #tpu.memory_space<vmem>>, %arg6: memref<8x256xf32, #tpu.memory_space<vmem>>) attributes {dimension_semantics = [#tpu.dimension_semantics<parallel>, #tpu.dimension_semantics<parallel>, #tpu.dimension_semantics<arbitrary>], iteration_bounds = array<i64: 1, 1, 1>, scalar_prefetch = 0 : i64, scratch_operands = 1 : i64, tpu.core_type = #tpu.core_type<tc>, window_params = [{transform_indices = @transform_0, window_bounds = array<i64: 8, 128>}, {transform_indices = @transform_1, window_bounds = array<i64: 256, 128>}, {transform_indices = @transform_2, window_bounds = array<i64: 8, 256>}]} {
    %c0_i32 = arith.constant 0 : i32
    %0 = arith.cmpi eq, %arg2, %c0_i32 : i32
    %1 = arith.extui %0 : i1 to i32
    %c0_i32_0 = arith.constant 0 : i32
    %2 = arith.cmpi ne, %1, %c0_i32_0 : i32
    scf.if %2 {
      %cst_10 = arith.constant 0.000000e+00 : f32
      %12 = vector.broadcast %cst_10 : f32 to vector<8x256xf32>
      %c0_11 = arith.constant 0 : index
      %c0_12 = arith.constant 0 : index
      %13 = vector.load %arg6[%c0_11, %c0_12] : memref<8x256xf32, #tpu.memory_space<vmem>>, vector<8x256xf32>
      tpu.vector_store %arg6[%c0_11, %c0_12], %12 {strides = array<i32>} : memref<8x256xf32, #tpu.memory_space<vmem>>, vector<8x256xf32>,
    } else {
    }
    %c0 = arith.constant 0 : index
    %c0_1 = arith.constant 0 : index
    %3 = vector.load %arg6[%c0, %c0_1] : memref<8x256xf32, #tpu.memory_space<vmem>>, vector<8x256xf32>
    %c0_2 = arith.constant 0 : index
    %c0_3 = arith.constant 0 : index
    %4 = vector.load %arg3[%c0_2, %c0_3] : memref<8x128xf32, #tpu.memory_space<vmem>>, vector<8x128xf32>
    %c0_4 = arith.constant 0 : index
    %c0_5 = arith.constant 0 : index
    %5 = vector.load %arg4[%c0_4, %c0_5] : memref<256x128xf32, #tpu.memory_space<vmem>>, vector<256x128xf32>
    %cst = arith.constant dense<0.000000e+00> : vector<8x256xf32>
    %6 = tpu.matmul %4, %5, %cst {dimension_numbers = #tpu.dot_dimension_numbers<[1], [1], [0], [0], [0, 0, 1, 0], [], []>} : vector<8x128xf32>, vector<256x128xf32>, vector<8x256xf32> -> vector<8x256xf32>
    %7 = arith.addf %3, %6 : vector<8x256xf32>
    %c0_6 = arith.constant 0 : index
    %c0_7 = arith.constant 0 : index
    %8 = vector.load %arg6[%c0_6, %c0_7] : memref<8x256xf32, #tpu.memory_space<vmem>>, vector<8x256xf32>
    tpu.vector_store %arg6[%c0_6, %c0_7], %7 {strides = array<i32>} : memref<8x256xf32, #tpu.memory_space<vmem>>, vector<8x256xf32>,
    %c0_i32_8 = arith.constant 0 : i32
    %9 = arith.cmpi eq, %arg2, %c0_i32_8 : i32
    %10 = arith.extui %9 : i1 to i32
    %c0_i32_9 = arith.constant 0 : i32
    %11 = arith.cmpi ne, %10, %c0_i32_9 : i32
    scf.if %11 {
      %c0_10 = arith.constant 0 : index
      %c0_11 = arith.constant 0 : index
      %12 = vector.load %arg6[%c0_10, %c0_11] : memref<8x256xf32, #tpu.memory_space<vmem>>, vector<8x256xf32>
      %c0_12 = arith.constant 0 : index
      %c0_13 = arith.constant 0 : index
      %13 = vector.load %arg5[%c0_12, %c0_13] : memref<8x256xf32, #tpu.memory_space<vmem>>, vector<8x256xf32>
      tpu.vector_store %arg5[%c0_12, %c0_13], %12 {strides = array<i32>} : memref<8x256xf32, #tpu.memory_space<vmem>>, vector<8x256xf32>,
    } else {
    }
    return
  }
  func.func @transform_0(%arg0: i32, %arg1: i32, %arg2: i32) -> (i32, i32) {
    %c0_i32 = arith.constant 0 : i32
    return %arg0, %arg2 : i32, i32
  }
  func.func @transform_1(%arg0: i32, %arg1: i32, %arg2: i32) -> (i32, i32) {
    %c0_i32 = arith.constant 0 : i32
    return %arg1, %arg2 : i32, i32
  }
  func.func @transform_2(%arg0: i32, %arg1: i32, %arg2: i32) -> (i32, i32) {
    %c0_i32 = arith.constant 0 : i32
    return %arg0, %arg1 : i32, i32
  }
}

</mosaic_0001>

<llo_original>
// kernel: tpu_custom_call.1
$region0: #{tpu_custom_call.1}
  #allocation0 [shape = 'u32[]', space=smem, size = 0x4, offset = 0x4, fixed_abs, tag = 'smem constant byte address 0x4 - core index']
  #allocation1 [shape = 'u32[144,128]{1,0:T(1,128)}', space=vmem, size = 0x12000, scoped, tag = 'internal scratch']
  #allocation2 [shape = 'f32[8,256]{1,0:T(8,128)}', space=vmem, size = 0x2000, scoped, tag = 'scratch operand']
  %s0 = inlined_call_operand.hbm [shape: f32[8,128], index: 0, kind: input, shape index: {}]
  %s1 = inlined_call_operand.hbm [shape: f32[256,128], index: 1, kind: input, shape index: {}]
  %s2 = inlined_call_operand.hbm [shape: f32[8,256], index: 2, kind: output, shape index: {}]
  %s3 = sld [smem:[#allocation0]]
  $region34: #{tpu_custom_call.1} parent=0
    _
  %s5 = ssub.s32 1, %s3
  %s6 = scalar_select 0, %s5, %s3
  $region1: #{tpu_custom_call.1} parent=0
    #allocation3 [shape = 'u8[4096]{0}', space=vmem, size = 0x1000, scoped, tag = 'input window, operand 0, single buffered']
    #allocation4 [shape = 's32[1]{0}', space=sflag, size = 0x4, scoped, tag = 'scoped memory for tpu_custom_call.1']
    #allocation5 [shape = 's32[1]{0}', space=sflag, size = 0x4, scoped, tag = 'scoped memory for tpu_custom_call.1']
    #allocation6 [shape = 'u8[131072]{0}', space=vmem, size = 0x20000, scoped, tag = 'input window, operand 1, single buffered']
    #allocation7 [shape = 's32[1]{0}', space=sflag, size = 0x4, scoped, tag = 'scoped memory for tpu_custom_call.1']
    #allocation8 [shape = 'u8[8192]{0}', space=vmem, size = 0x2000, scoped, tag = 'output window, operand 0, single buffered']
    %7 = vsyncpa [#allocation4], 0
    %8 = vsyncpa [#allocation7], 0
    %9 = vsyncpa [#allocation5], 0
    // Predicated region
    $region2: #{tpu_custom_call.1} parent=1 // pred_check
      _
    $region3: #{tpu_custom_call.1} parent=1 // pred_check_branch
      %11 = sbr.rel (0) target = $region5
    $region4: #{tpu_custom_call.1} parent=1 // pred_region
      %s13 = ssub.s32 128, 128
      %14 = vsyncadd [#allocation4], %s13
      %s16 = sshll.u32 [#allocation3], 4
      %s17 = int_to_ptr.vmem [resolvable:$true] %s16
      %19 = dma.hbm_to_vmem [thread:$0]  %s0, 128, %s17, [#allocation4]
    $region5: #{tpu_custom_call.1} parent=1 // pred_fallthru
      _
    // Predicated region
    $region6: #{tpu_custom_call.1} parent=1 // pred_check
      _
    $region7: #{tpu_custom_call.1} parent=1 // pred_check_branch
      %21 = sbr.rel (0) target = $region9
    $region8: #{tpu_custom_call.1} parent=1 // pred_region
      %s23 = ssub.s32 4096, 4096
      %24 = vsyncadd [#allocation7], %s23
      %s25 = sshll.u32 [#allocation6], 4
      %s26 = int_to_ptr.vmem [resolvable:$true] %s25
      %31 = dma.hbm_to_vmem [thread:$0]  %s1, 4096, %s26, [#allocation7], 128, 128, 8
    $region9: #{tpu_custom_call.1} parent=1 // pred_fallthru
      _
    // Predicated region
    $region10: #{tpu_custom_call.1} parent=1 // pred_check
      _
    $region11: #{tpu_custom_call.1} parent=1 // pred_check_branch
      %33 = sbr.rel (0) target = $region13
    $region12: #{tpu_custom_call.1} parent=1 // pred_region
      %34 = dma.done [#allocation4], 128
    $region13: #{tpu_custom_call.1} parent=1 // pred_fallthru
      _
    // Predicated region
    $region14: #{tpu_custom_call.1} parent=1 // pred_check
      _
    $region15: #{tpu_custom_call.1} parent=1 // pred_check_branch
      %36 = sbr.rel (0) target = $region17
    $region16: #{tpu_custom_call.1} parent=1 // pred_region
      %37 = dma.done [#allocation7], 4096
    $region17: #{tpu_custom_call.1} parent=1 // pred_fallthru
      _
    %p38 = scmp.eq.s32.totalorder 0, 0
    // Predicated region
    $region18: #{tpu_custom_call.1} parent=1 // pred_check
      %p39 = pneg %p38
    $region19: #{tpu_custom_call.1} parent=1 // pred_check_branch
      %41 = sbr.rel (%p39) target = $region21
    $region20: #{tpu_custom_call.1} parent=1 // pred_region
      %42 = vst [vmem:[#allocation2] sm:$0xff] 0.0
      %43 = vst [vmem:[#allocation2 + $0x8] sm:$0xff] 0.0
    $region21: #{tpu_custom_call.1} parent=1 // pred_fallthru
      _
    %v44 = vld [vmem:[#allocation2] sm:$0xff]
    %v45 = vld [vmem:[#allocation2 + $0x8] sm:$0xff]
    %v46 = vld [vmem:[#allocation3] sm:$0xff]
    %v47 = vld [vmem:[#allocation6] sm:$0xff]
    %v48 = vld [vmem:[#allocation6 + $0x8] sm:$0xff]
    %v49 = vld [vmem:[#allocation6 + $0x10] sm:$0xff]
    %v50 = vld [vmem:[#allocation6 + $0x18] sm:$0xff]
    %v51 = vld [vmem:[#allocation6 + $0x20] sm:$0xff]
    %v52 = vld [vmem:[#allocation6 + $0x28] sm:$0xff]
    %v53 = vld [vmem:[#allocation6 + $0x30] sm:$0xff]
    %v54 = vld [vmem:[#allocation6 + $0x38] sm:$0xff]
    %v55 = vld [vmem:[#allocation6 + $0x40] sm:$0xff]
    %v56 = vld [vmem:[#allocation6 + $0x48] sm:$0xff]
    %v57 = vld [vmem:[#allocation6 + $0x50] sm:$0xff]
    %v58 = vld [vmem:[#allocation6 + $0x58] sm:$0xff]
    %v59 = vld [vmem:[#allocation6 + $0x60] sm:$0xff]
    %v60 = vld [vmem:[#allocation6 + $0x68] sm:$0xff]
    %v61 = vld [vmem:[#allocation6 + $0x70] sm:$0xff]
    %v62 = vld [vmem:[#allocation6 + $0x78] sm:$0xff]
    %v63 = vld [vmem:[#allocation6 + $0x80] sm:$0xff]
    %v64 = vld [vmem:[#allocation6 + $0x88] sm:$0xff]
    %v65 = vld [vmem:[#allocation6 + $0x90] sm:$0xff]
    %v66 = vld [vmem:[#allocation6 + $0x98] sm:$0xff]
    %v67 = vld [vmem:[#allocation6 + $0xa0] sm:$0xff]
    %v68 = vld [vmem:[#allocation6 + $0xa8] sm:$0xff]
    %v69 = vld [vmem:[#allocation6 + $0xb0] sm:$0xff]
    %v70 = vld [vmem:[#allocation6 + $0xb8] sm:$0xff]
    %v71 = vld [vmem:[#allocation6 + $0xc0] sm:$0xff]
    %v72 = vld [vmem:[#allocation6 + $0xc8] sm:$0xff]
    %v73 = vld [vmem:[#allocation6 + $0xd0] sm:$0xff]
    %v74 = vld [vmem:[#allocation6 + $0xd8] sm:$0xff]
    %v75 = vld [vmem:[#allocation6 + $0xe0] sm:$0xff]
    %v76 = vld [vmem:[#allocation6 + $0xe8] sm:$0xff]
    %v77 = vld [vmem:[#allocation6 + $0xf0] sm:$0xff]
    %v78 = vld [vmem:[#allocation6 + $0xf8] sm:$0xff]
    %79 = vmatprep.subr.mxu0 0.0
    %80 = vmatpush1.xpose.msra.mxu0 %v62
    %81 = vmatprep.subr.mxu0 0.0
    %82 = vmatpush1.xpose.msra.mxu0 %v61
    %83 = vmatprep.subr.mxu0 0.0
    %84 = vmatpush1.xpose.msra.mxu0 %v60
    %85 = vmatprep.subr.mxu0 0.0
    %86 = vmatpush1.xpose.msra.mxu0 %v59
    %87 = vmatprep.subr.mxu0 0.0
    %88 = vmatpush1.xpose.msra.mxu0 %v58
    %89 = vmatprep.subr.mxu0 0.0
    %90 = vmatpush1.xpose.msra.mxu0 %v57
    %91 = vmatprep.subr.mxu0 0.0
    %92 = vmatpush1.xpose.msra.mxu0 %v56
    %93 = vmatprep.subr.mxu0 0.0
    %94 = vmatpush1.xpose.msra.mxu0 %v55
    %95 = vmatprep.subr.mxu0 0.0
    %96 = vmatpush1.xpose.msra.mxu0 %v54
    %97 = vmatprep.subr.mxu0 0.0
    %98 = vmatpush1.xpose.msra.mxu0 %v53
    %99 = vmatprep.subr.mxu0 0.0
    %100 = vmatpush1.xpose.msra.mxu0 %v52
    %101 = vmatprep.subr.mxu0 0.0
    %102 = vmatpush1.xpose.msra.mxu0 %v51
    %103 = vmatprep.subr.mxu0 0.0
    %104 = vmatpush1.xpose.msra.mxu0 %v50
    %105 = vmatprep.subr.mxu0 0.0
    %106 = vmatpush1.xpose.msra.mxu0 %v49
    %107 = vmatprep.subr.mxu0 0.0
    %108 = vmatpush1.xpose.msra.mxu0 %v48
    %109 = vmatprep.subr.mxu0 0.0
    %110 = vmatpush1.xpose.msra.mxu0 %v47
    %111 = vmatprep.subr.mxu0 0.0
    %112 = vmatpush2.xpose.msra.mxu0 %v78
    %113 = vmatprep.subr.mxu0 0.0
    %114 = vmatpush2.xpose.msra.mxu0 %v77
    %115 = vmatprep.subr.mxu0 0.0
    %116 = vmatpush2.xpose.msra.mxu0 %v76
    %117 = vmatprep.subr.mxu0 0.0
    %118 = vmatpush2.xpose.msra.mxu0 %v75
    %119 = vmatprep.subr.mxu0 0.0
    %120 = vmatpush2.xpose.msra.mxu0 %v74
    %121 = vmatprep.subr.mxu0 0.0
    %122 = vmatpush2.xpose.msra.mxu0 %v73
    %123 = vmatprep.subr.mxu0 0.0
    %124 = vmatpush2.xpose.msra.mxu0 %v72
    %125 = vmatprep.subr.mxu0 0.0
    %126 = vmatpush2.xpose.msra.mxu0 %v71
    %127 = vmatprep.subr.mxu0 0.0
    %128 = vmatpush2.xpose.msra.mxu0 %v70
    %129 = vmatprep.subr.mxu0 0.0
    %130 = vmatpush2.xpose.msra.mxu0 %v69
    %131 = vmatprep.subr.mxu0 0.0
    %132 = vmatpush2.xpose.msra.mxu0 %v68
    %133 = vmatprep.subr.mxu0 0.0
    %134 = vmatpush2.xpose.msra.mxu0 %v67
    %135 = vmatprep.subr.mxu0 0.0
    %136 = vmatpush2.xpose.msra.mxu0 %v66
    %137 = vmatprep.subr.mxu0 0.0
    %138 = vmatpush2.xpose.msra.mxu0 %v65
    %139 = vmatprep.subr.mxu0 0.0
    %140 = vmatpush2.xpose.msra.mxu0 %v64
    %141 = vmatprep.subr.mxu0 0.0
    %142 = vmatpush2.xpose.msra.mxu0 %v63
    %143 = vmatprep.mubr.f32.mxu0 0.0
    %144 = vmatmul.mubr.f32.gmra.mxu0 %v46
    %v145 = vpop.f32.mrf.mxu0
    %v146 = vadd.f32 0.0, %v145
    %v147 = vpop.f32.mrf.mxu0
    %v148 = vadd.f32 0.0, %v147
    %149 = vdwg.mxu0
    %v150 = vadd.f32 %v44, %v146
    %v151 = vadd.f32 %v45, %v148
    %152 = vst [vmem:[#allocation2] sm:$0xff] %v150
    %153 = vst [vmem:[#allocation2 + $0x8] sm:$0xff] %v151
    // Predicated region
    $region22: #{tpu_custom_call.1} parent=1 // pred_check
      %p154 = pneg %p38
    $region23: #{tpu_custom_call.1} parent=1 // pred_check_branch
      %156 = sbr.rel (%p154) target = $region25
    $region24: #{tpu_custom_call.1} parent=1 // pred_region
      %v157 = vld [vmem:[#allocation2] sm:$0xff]
      %v158 = vld [vmem:[#allocation2 + $0x8] sm:$0xff]
      %159 = vst [vmem:[#allocation8] sm:$0xff] %v157
      %160 = vst [vmem:[#allocation8 + $0x8] sm:$0xff] %v158
    $region25: #{tpu_custom_call.1} parent=1 // pred_fallthru
      _
    // Predicated region
    $region26: #{tpu_custom_call.1} parent=1 // pred_check
      _
    $region27: #{tpu_custom_call.1} parent=1 // pred_check_branch
      %162 = sbr.rel (0) target = $region29
    $region28: #{tpu_custom_call.1} parent=1 // pred_region
      %s164 = ssub.s32 256, 256
      %165 = vsyncadd [#allocation5], %s164
      %s167 = sshll.u32 [#allocation8], 4
      %s168 = int_to_ptr.vmem [resolvable:$true] %s167
      %170 = dma.vmem_to_hbm [thread:$0]  %s168, 256, %s2, [#allocation5]
    $region29: #{tpu_custom_call.1} parent=1 // pred_fallthru
      _
    // Predicated region
    $region30: #{tpu_custom_call.1} parent=1 // pred_check
      _
    $region31: #{tpu_custom_call.1} parent=1 // pred_check_branch
      %172 = sbr.rel (0) target = $region33
    $region32: #{tpu_custom_call.1} parent=1 // pred_region
      %173 = dma.done [#allocation5], 256
    $region33: #{tpu_custom_call.1} parent=1 // pred_fallthru
      _
    %174 = vsyncpa [#allocation4], 1
    %175 = vsyncpa [#allocation7], 1
    %176 = vsyncpa [#allocation5], 1

</llo_original>
